<compile_context>
chip_gen: v7x
topology: tpu7x:2x2x1
jax: 0.10.0
libtpu: 0.0.40
codegen_flags: <defaults>
</compile_context>

<pallas_src>
import jax
import jax.numpy as jnp
from jax import lax
from jax.experimental import pallas as pl
from jax.experimental.pallas import tpu as pltpu

LANE = 128
MIN_TILE = 8 * LANE          # smallest f32 tile handled by the kernel path
MAX_BLOCK_ROWS = 4096        # 4096 * 128 * 4B = 2 MiB per f32 input block


def _num_tensorcores():
    """Best-effort TensorCores-per-chip (1 on v5e/v6e, 2 on v7x).

    Falls back to 2, which is harmless (a short serial outer loop) on
    single-TC chips and uses both cores on v7x.
    """
    try:
        info = pltpu.get_tpu_info()
        for name in ("num_cores", "core_count", "num_tensorcores",
                     "tensorcores_per_chip", "cores_per_chip"):
            v = getattr(info, name, None)
            if isinstance(v, int) and 1 <= v <= 8:
                return v
    except Exception:
        pass
    try:
        v = getattr(jax.devices()[0], "num_cores", None)
        if isinstance(v, int) and 1 <= v <= 8:
            return v
    except Exception:
        pass
    return 2


def _make_dice_kernel(block_rows, rows, blocks_per_split, need_mask):
    """Build the kernel, closed over static tiling parameters."""
    sub_groups = block_rows // 8
    unroll = min(8, sub_groups)

    def _partial_sums(x_ref, t_ref, masked, valid):
        # Slab-wise streaming reduce: never materializes a full (block_rows,128)
        # intermediate in VMEM; only ~4 vregs of carries stay live.
        def body(k, carry):
            p_acc, s_acc = carry
            r = pl.multiple_of(k * 8, 8)
            x = x_ref[pl.ds(r, 8), :].astype(jnp.float32)
            t = t_ref[pl.ds(r, 8), :].astype(jnp.float32)
            p = x * t
            s = x + t                       # sum(x) + sum(t) == sum(x + t)
            if masked:
                row_ids = lax.broadcasted_iota(jnp.int32, (8, LANE), 0) + k * 8
                m = row_ids < valid
                # jnp.where (select), NOT multiply-by-mask: padded rows have
                # unspecified contents and must not propagate NaN/Inf.
                p = jnp.where(m, p, 0.0)
                s = jnp.where(m, s, 0.0)
            return p_acc + p, s_acc + s

        init = (jnp.zeros((8, LANE), jnp.float32),
                jnp.zeros((8, LANE), jnp.float32))
        return lax.fori_loop(0, sub_groups, body, init, unroll=unroll)

    def kernel(x_ref, t_ref, acc_ref):
        # acc_ref: (1, 2, 8, LANE) f32 output block, resident across the inner
        # (reduction) grid axis.  acc[0,0] accumulates x*t, acc[0,1] x+t.
        @pl.when(pl.program_id(1) == 0)
        def _init():
            acc_ref[...] = jnp.zeros_like(acc_ref)

        if need_mask:
            # Global (unclamped) block index; rows at/after `rows` are padding
            # (partial edge block) or duplicated clamped fetches -> zeroed.
            g = pl.program_id(0) * blocks_per_split + pl.program_id(1)
            valid = rows - g * block_rows
            is_full = valid >= block_rows

            @pl.when(is_full)
            def _full():
                p, s = _partial_sums(x_ref, t_ref, False, None)
                acc_ref[0, 0] += p
                acc_ref[0, 1] += s

            @pl.when(jnp.logical_not(is_full))
            def _partial():
                p, s = _partial_sums(x_ref, t_ref, True, valid)
                acc_ref[0, 0] += p
                acc_ref[0, 1] += s
        else:
            p, s = _partial_sums(x_ref, t_ref, False, None)
            acc_ref[0, 0] += p
            acc_ref[0, 1] += s

    return kernel


def dice_loss(inp, target, smooth=1.0):
    """Pallas implementation of DiceLoss.forward(input, target)."""
    x = inp.reshape(-1)
    t = target.reshape(-1)
    total = x.shape[0]

    main = (total // MIN_TILE) * MIN_TILE     # prefix handled by the kernel

    inter = jnp.float32(0.0)
    sums = jnp.float32(0.0)

    if main < total:
        # Ragged tail (< 1024 elements): fold in with plain JAX instead of
        # padding the whole array.  Vanishes when total % 1024 == 0.
        xt = x[main:].astype(jnp.float32)
        tt = t[main:].astype(jnp.float32)
        inter = inter + jnp.sum(xt * tt)
        sums = sums + jnp.sum(xt) + jnp.sum(tt)

    if main > 0:
        rows = main // LANE                       # multiple of 8, >= 8
        block_rows = min(MAX_BLOCK_ROWS, rows)    # multiple of 8
        n_blocks = -(-rows // block_rows)
        n_splits = max(1, min(_num_tensorcores(), n_blocks))
        bps = -(-n_blocks // n_splits)            # blocks per split
        need_mask = (n_splits * bps * block_rows != rows)

        x_main = x if main == total else x[:main]
        t_main = t if main == total else t[:main]
        x2 = x_main.reshape(rows, LANE)           # free reshape, no copy
        t2 = t_main.reshape(rows, LANE)

        def in_map(c, i):
            # Clamp so we never request a fully out-of-bounds block; the
            # in-kernel mask (based on the unclamped index) zeroes any
            # duplicated / overhanging rows.
            return (jnp.minimum(c * bps + i, n_blocks - 1), 0)

        bytes_accessed = (main * (x2.dtype.itemsize + t2.dtype.itemsize)
                          + n_splits * 2 * 8 * LANE * 4)

        acc = pl.pallas_call(
            _make_dice_kernel(block_rows, rows, bps, need_mask),
            out_shape=jax.ShapeDtypeStruct((n_splits, 2, 8, LANE), jnp.float32),
            grid=(n_splits, bps),
            in_specs=[
                pl.BlockSpec((block_rows, LANE), in_map),
                pl.BlockSpec((block_rows, LANE), in_map),
            ],
            out_specs=pl.BlockSpec((1, 2, 8, LANE), lambda c, i: (c, 0, 0, 0)),
            compiler_params=pltpu.CompilerParams(
                dimension_semantics=("parallel", "arbitrary"),
            ),
            cost_estimate=pl.CostEstimate(
                flops=2 * main,
                transcendentals=0,
                bytes_accessed=bytes_accessed,
            ),
        )(x2, t2)

        # Final cross-lane/sublane reduce of a few KiB of partials in plain JAX.
        inter = inter + jnp.sum(acc[:, 0])
        sums = sums + jnp.sum(acc[:, 1])

    dice = (2.0 * inter + smooth) / (sums + smooth)
    return 1.0 - dice


def dice_loss_ref(inp, target):
    """Pure-JAX reference matching the PyTorch module exactly."""
    smooth = 1.0
    x = inp.reshape(-1).astype(jnp.float32)
    t = target.reshape(-1).astype(jnp.float32)
    inter = jnp.sum(x * t)
    loss = (2.0 * inter + smooth) / (jnp.sum(x) + jnp.sum(t) + smooth)
    return 1.0 - loss


if __name__ == "__main__":
    key = jax.random.PRNGKey(0)
    k1, k2, k3, k4 = jax.random.split(key, 4)

    # NCHW, like a segmentation head: batch=2, channels=4, spatial=16x16.
    shape = (2, 4, 16, 16)
    inp = jax.nn.sigmoid(jax.random.normal(k1, shape, dtype=jnp.float32))
    target = (jax.random.uniform(k2, shape) > 0.5).astype(jnp.float32)

    out = jax.block_until_ready(dice_loss(inp, target))
    ref = dice_loss_ref(inp, target)
    assert jnp.allclose(out, ref, rtol=1e-5, atol=1e-6), (out, ref)

    # Small ragged case (total = 1155, not a multiple of 1024) to exercise the
    # kernel + JAX-tail path.
    shape2 = (3, 5, 7, 11)
    inp2 = jax.nn.sigmoid(jax.random.normal(k3, shape2, dtype=jnp.float32))
    target2 = (jax.random.uniform(k4, shape2) > 0.5).astype(jnp.float32)
    out2 = jax.block_until_ready(dice_loss(inp2, target2))
    ref2 = dice_loss_ref(inp2, target2)
    assert jnp.allclose(out2, ref2, rtol=1e-5, atol=1e-6), (out2, ref2)

    print("KERNEL_OK")
</pallas_src>

<mosaic_0001>
module attributes {stable_mosaic.version = 11 : i64} {
  func.func @kernel(%arg0: i32, %arg1: i32, %arg2: memref<16x128xf32, #tpu.memory_space<vmem>>, %arg3: memref<16x128xf32, #tpu.memory_space<vmem>>, %arg4: memref<1x2x8x128xf32, #tpu.memory_space<vmem>>) attributes {dimension_semantics = [#tpu.dimension_semantics<parallel>, #tpu.dimension_semantics<arbitrary>], iteration_bounds = array<i64: 1, 1>, scalar_prefetch = 0 : i64, scratch_operands = 0 : i64, tpu.core_type = #tpu.core_type<tc>, window_params = [{transform_indices = @transform_0, window_bounds = array<i64: 16, 128>}, {transform_indices = @transform_1, window_bounds = array<i64: 16, 128>}, {transform_indices = @transform_2, window_bounds = array<i64: 1, 2, 8, 128>}]} {
    %c0_i32 = arith.constant 0 : i32
    %0 = arith.cmpi eq, %arg1, %c0_i32 : i32
    %1 = arith.extui %0 : i1 to i32
    %c0_i32_0 = arith.constant 0 : i32
    %2 = arith.cmpi ne, %1, %c0_i32_0 : i32
    scf.if %2 {
      %cst_22 = arith.constant 0.000000e+00 : f32
      %37 = vector.broadcast %cst_22 : f32 to vector<1x2x8x128xf32>
      %c0_23 = arith.constant 0 : index
      %c0_24 = arith.constant 0 : index
      %c0_25 = arith.constant 0 : index
      %c0_26 = arith.constant 0 : index
      %38 = vector.load %arg4[%c0_23, %c0_24, %c0_25, %c0_26] : memref<1x2x8x128xf32, #tpu.memory_space<vmem>>, vector<1x2x8x128xf32>
      tpu.vector_store %arg4[%c0_23, %c0_24, %c0_25, %c0_26], %37 {strides = array<i32>} : memref<1x2x8x128xf32, #tpu.memory_space<vmem>>, vector<1x2x8x128xf32>,
    } else {
    }
    %cst = arith.constant 0.000000e+00 : f32
    %3 = vector.broadcast %cst : f32 to vector<8x128xf32>
    %cst_1 = arith.constant 0.000000e+00 : f32
    %4 = vector.broadcast %cst_1 : f32 to vector<8x128xf32>
    %c0_i32_2 = arith.constant 0 : i32
    %c8_i32 = arith.constant 8 : i32
    %5 = arith.muli %c0_i32_2, %c8_i32 : i32
    %6 = tpu.assume_multiple %5, 8 : i32
    %7 = arith.index_cast %6 : i32 to index
    %c0 = arith.constant 0 : index
    %8 = vector.load %arg2[%7, %c0] : memref<16x128xf32, #tpu.memory_space<vmem>>, vector<8x128xf32>
    %9 = arith.index_cast %6 : i32 to index
    %c0_3 = arith.constant 0 : index
    %10 = vector.load %arg3[%9, %c0_3] : memref<16x128xf32, #tpu.memory_space<vmem>>, vector<8x128xf32>
    %11 = arith.mulf %8, %10 : vector<8x128xf32>
    %12 = arith.addf %8, %10 : vector<8x128xf32>
    %13 = arith.addf %3, %11 : vector<8x128xf32>
    %14 = arith.addf %4, %12 : vector<8x128xf32>
    %c1_i32 = arith.constant 1 : i32
    %c8_i32_4 = arith.constant 8 : i32
    %15 = arith.muli %c1_i32, %c8_i32_4 : i32
    %16 = tpu.assume_multiple %15, 8 : i32
    %17 = arith.index_cast %16 : i32 to index
    %c0_5 = arith.constant 0 : index
    %18 = vector.load %arg2[%17, %c0_5] : memref<16x128xf32, #tpu.memory_space<vmem>>, vector<8x128xf32>
    %19 = arith.index_cast %16 : i32 to index
    %c0_6 = arith.constant 0 : index
    %20 = vector.load %arg3[%19, %c0_6] : memref<16x128xf32, #tpu.memory_space<vmem>>, vector<8x128xf32>
    %21 = arith.mulf %18, %20 : vector<8x128xf32>
    %22 = arith.addf %18, %20 : vector<8x128xf32>
    %23 = arith.addf %13, %21 : vector<8x128xf32>
    %24 = arith.addf %14, %22 : vector<8x128xf32>
    %c2_i32 = arith.constant 2 : i32
    %c0_7 = arith.constant 0 : index
    %c0_8 = arith.constant 0 : index
    %c0_9 = arith.constant 0 : index
    %c0_10 = arith.constant 0 : index
    %25 = vector.load %arg4[%c0_7, %c0_8, %c0_9, %c0_10] : memref<1x2x8x128xf32, #tpu.memory_space<vmem>>, vector<1x1x8x128xf32>
    %26 = vector.shape_cast %25 : vector<1x1x8x128xf32> to vector<8x128xf32>
    %27 = arith.addf %26, %23 : vector<8x128xf32>
    %c0_11 = arith.constant 0 : index
    %c0_12 = arith.constant 0 : index
    %c0_13 = arith.constant 0 : index
    %c0_14 = arith.constant 0 : index
    %28 = vector.load %arg4[%c0_11, %c0_12, %c0_13, %c0_14] : memref<1x2x8x128xf32, #tpu.memory_space<vmem>>, vector<1x1x8x128xf32>
    %29 = vector.shape_cast %28 : vector<1x1x8x128xf32> to vector<8x128xf32>
    %30 = vector.shape_cast %27 : vector<8x128xf32> to vector<1x1x8x128xf32>
    tpu.vector_store %arg4[%c0_11, %c0_12, %c0_13, %c0_14], %30 {strides = array<i32>} : memref<1x2x8x128xf32, #tpu.memory_space<vmem>>, vector<1x1x8x128xf32>,
    %c0_15 = arith.constant 0 : index
    %c1 = arith.constant 1 : index
    %c0_16 = arith.constant 0 : index
    %c0_17 = arith.constant 0 : index
    %31 = vector.load %arg4[%c0_15, %c1, %c0_16, %c0_17] : memref<1x2x8x128xf32, #tpu.memory_space<vmem>>, vector<1x1x8x128xf32>
    %32 = vector.shape_cast %31 : vector<1x1x8x128xf32> to vector<8x128xf32>
    %33 = arith.addf %32, %24 : vector<8x128xf32>
    %c0_18 = arith.constant 0 : index
    %c1_19 = arith.constant 1 : index
    %c0_20 = arith.constant 0 : index
    %c0_21 = arith.constant 0 : index
    %34 = vector.load %arg4[%c0_18, %c1_19, %c0_20, %c0_21] : memref<1x2x8x128xf32, #tpu.memory_space<vmem>>, vector<1x1x8x128xf32>
    %35 = vector.shape_cast %34 : vector<1x1x8x128xf32> to vector<8x128xf32>
    %36 = vector.shape_cast %33 : vector<8x128xf32> to vector<1x1x8x128xf32>
    tpu.vector_store %arg4[%c0_18, %c1_19, %c0_20, %c0_21], %36 {strides = array<i32>} : memref<1x2x8x128xf32, #tpu.memory_space<vmem>>, vector<1x1x8x128xf32>,
    return
  }
  func.func @transform_0(%arg0: i32, %arg1: i32) -> (i32, i32) {
    %c1_i32 = arith.constant 1 : i32
    %0 = arith.muli %arg0, %c1_i32 : i32
    %1 = arith.addi %0, %arg1 : i32
    %c0_i32 = arith.constant 0 : i32
    %2 = arith.minsi %1, %c0_i32 : i32
    %c0_i32_0 = arith.constant 0 : i32
    %c0_i32_1 = arith.constant 0 : i32
    return %2, %c0_i32_0 : i32, i32
  }
  func.func @transform_1(%arg0: i32, %arg1: i32) -> (i32, i32) {
    %c1_i32 = arith.constant 1 : i32
    %0 = arith.muli %arg0, %c1_i32 : i32
    %1 = arith.addi %0, %arg1 : i32
    %c0_i32 = arith.constant 0 : i32
    %2 = arith.minsi %1, %c0_i32 : i32
    %c0_i32_0 = arith.constant 0 : i32
    %c0_i32_1 = arith.constant 0 : i32
    return %2, %c0_i32_0 : i32, i32
  }
  func.func @transform_2(%arg0: i32, %arg1: i32) -> (i32, i32, i32, i32) {
    %c0_i32 = arith.constant 0 : i32
    %c0_i32_0 = arith.constant 0 : i32
    %c0_i32_1 = arith.constant 0 : i32
    %c0_i32_2 = arith.constant 0 : i32
    return %arg0, %c0_i32, %c0_i32_0, %c0_i32_1 : i32, i32, i32, i32
  }
}

</mosaic_0001>

<llo_original>
// kernel: tpu_custom_call.1
$region0: #{tpu_custom_call.1}
  #allocation0 [shape = 'u32[]', space=smem, size = 0x4, offset = 0x4, fixed_abs, tag = 'smem constant byte address 0x4 - core index']
  #allocation1 [shape = 'u32[144,128]{1,0:T(1,128)}', space=vmem, size = 0x12000, scoped, tag = 'internal scratch']
  %s0 = inlined_call_operand.hbm [shape: f32[16,128], index: 0, kind: input, shape index: {}]
  %s1 = inlined_call_operand.hbm [shape: f32[16,128], index: 1, kind: input, shape index: {}]
  %s2 = inlined_call_operand.hbm [shape: f32[1,2,8,128], index: 2, kind: output, shape index: {}]
  %s3 = sld [smem:[#allocation0]]
  $region30: #{tpu_custom_call.1} parent=0
    _
  %s5 = ssub.s32 1, %s3
  %s6 = scalar_select 0, %s5, %s3
  $region1: #{tpu_custom_call.1} parent=0
    #allocation2 [shape = 'u8[8192]{0}', space=vmem, size = 0x2000, scoped, tag = 'input window, operand 0, single buffered']
    #allocation3 [shape = 's32[1]{0}', space=sflag, size = 0x4, scoped, tag = 'scoped memory for tpu_custom_call.1']
    #allocation4 [shape = 's32[1]{0}', space=sflag, size = 0x4, scoped, tag = 'scoped memory for tpu_custom_call.1']
    #allocation5 [shape = 'u8[8192]{0}', space=vmem, size = 0x2000, scoped, tag = 'input window, operand 1, single buffered']
    #allocation6 [shape = 's32[1]{0}', space=sflag, size = 0x4, scoped, tag = 'scoped memory for tpu_custom_call.1']
    #allocation7 [shape = 'u8[8192]{0}', space=vmem, size = 0x2000, scoped, tag = 'output window, operand 0, single buffered']
    %7 = vsyncpa [#allocation3], 0
    %8 = vsyncpa [#allocation6], 0
    %9 = vsyncpa [#allocation4], 0
    // Predicated region
    $region2: #{tpu_custom_call.1} parent=1 // pred_check
      _
    $region3: #{tpu_custom_call.1} parent=1 // pred_check_branch
      %11 = sbr.rel (0) target = $region5
    $region4: #{tpu_custom_call.1} parent=1 // pred_region
      %s12 = sadd.s32 0, 0
      %p13 = scmp.lt.s32.totalorder %s12, 0
      %s14 = scalar_select %p13, %s12, 0
      %s15 = smul.u32 2, %s14
      %s17 = ssub.s32 256, 256
      %18 = vsyncadd [#allocation3], %s17
      %s19 = smul.addr %s15, 128
      %s20 = scalar_lea.hbm %s0, %s19
      %s21 = sshll.u32 [#allocation2], 4
      %s22 = int_to_ptr.vmem [resolvable:$true] %s21
      %27 = dma.hbm_to_vmem [thread:$0]  %s20, 256, %s22, [#allocation3], 128, 128, 8
    $region5: #{tpu_custom_call.1} parent=1 // pred_fallthru
      _
    // Predicated region
    $region6: #{tpu_custom_call.1} parent=1 // pred_check
      _
    $region7: #{tpu_custom_call.1} parent=1 // pred_check_branch
      %29 = sbr.rel (0) target = $region9
    $region8: #{tpu_custom_call.1} parent=1 // pred_region
      %s30 = sadd.s32 0, 0
      %p31 = scmp.lt.s32.totalorder %s30, 0
      %s32 = scalar_select %p31, %s30, 0
      %s33 = smul.u32 2, %s32
      %s35 = ssub.s32 256, 256
      %36 = vsyncadd [#allocation6], %s35
      %s37 = smul.addr %s33, 128
      %s38 = scalar_lea.hbm %s1, %s37
      %s39 = sshll.u32 [#allocation5], 4
      %s40 = int_to_ptr.vmem [resolvable:$true] %s39
      %45 = dma.hbm_to_vmem [thread:$0]  %s38, 256, %s40, [#allocation6], 128, 128, 8
    $region9: #{tpu_custom_call.1} parent=1 // pred_fallthru
      _
    // Predicated region
    $region10: #{tpu_custom_call.1} parent=1 // pred_check
      _
    $region11: #{tpu_custom_call.1} parent=1 // pred_check_branch
      %47 = sbr.rel (0) target = $region13
    $region12: #{tpu_custom_call.1} parent=1 // pred_region
      %48 = dma.done [#allocation3], 256
    $region13: #{tpu_custom_call.1} parent=1 // pred_fallthru
      _
    // Predicated region
    $region14: #{tpu_custom_call.1} parent=1 // pred_check
      _
    $region15: #{tpu_custom_call.1} parent=1 // pred_check_branch
      %50 = sbr.rel (0) target = $region17
    $region16: #{tpu_custom_call.1} parent=1 // pred_region
      %51 = dma.done [#allocation6], 256
    $region17: #{tpu_custom_call.1} parent=1 // pred_fallthru
      _
    %s52 = sadd.s32 0, 0
    %p53 = scmp.lt.s32.totalorder %s52, 0
    %s54 = scalar_select %p53, %s52, 0
    %s55 = smul.u32 2, %s54
    %s56 = sadd.s32 0, 0
    %p57 = scmp.lt.s32.totalorder %s56, 0
    %s58 = scalar_select %p57, %s56, 0
    %s59 = smul.u32 2, %s58
    %p60 = scmp.eq.s32.totalorder 0, 0
    // Predicated region
    $region18: #{tpu_custom_call.1} parent=1 // pred_check
      %p61 = pneg %p60
    $region19: #{tpu_custom_call.1} parent=1 // pred_check_branch
      %63 = sbr.rel (%p61) target = $region21
    $region20: #{tpu_custom_call.1} parent=1 // pred_region
      %64 = vst [vmem:[#allocation7] sm:$0xff] 0.0
      %65 = vst [vmem:[#allocation7 + $0x8] sm:$0xff] 0.0
    $region21: #{tpu_custom_call.1} parent=1 // pred_fallthru
      _
    %v66 = vld [vmem:[#allocation2] sm:$0xff]
    %v67 = vld [vmem:[#allocation5] sm:$0xff]
    %v68 = vmul.f32 %v66, %v67
    %v69 = vadd.f32 %v66, %v67
    %v70 = vadd.f32 %v68, 0.0
    %v71 = vadd.f32 %v69, 0.0
    %s72 = scalar_lea.vmem [#allocation2], 8
    %v73 = vld [vmem:[%s72] sm:$0xff]
    %s74 = scalar_lea.vmem [#allocation5], 8
    %v75 = vld [vmem:[%s74] sm:$0xff]
    %v76 = vmul.f32 %v73, %v75
    %v77 = vadd.f32 %v73, %v75
    %v78 = vadd.f32 %v70, %v76
    %v79 = vadd.f32 %v71, %v77
    %v80 = vld [vmem:[#allocation7] sm:$0xff]
    %v81 = vadd.f32 %v80, %v78
    %82 = vst [vmem:[#allocation7] sm:$0xff] %v81
    %s83 = scalar_lea.vmem [#allocation7], 8
    %v84 = vld [vmem:[%s83] sm:$0xff]
    %v85 = vadd.f32 %v84, %v79
    %86 = vst [vmem:[%s83] sm:$0xff] %v85
    // Predicated region
    $region22: #{tpu_custom_call.1} parent=1 // pred_check
      _
    $region23: #{tpu_custom_call.1} parent=1 // pred_check_branch
      %88 = sbr.rel (0) target = $region25
    $region24: #{tpu_custom_call.1} parent=1 // pred_region
      %s90 = ssub.s32 256, 256
      %91 = vsyncadd [#allocation4], %s90
      %s92 = sshll.u32 [#allocation7], 4
      %s93 = int_to_ptr.vmem [resolvable:$true] %s92
      %98 = dma.vmem_to_hbm [thread:$0]  %s93, 256, %s2, [#allocation4], 128, 128, 8
    $region25: #{tpu_custom_call.1} parent=1 // pred_fallthru
      _
    // Predicated region
    $region26: #{tpu_custom_call.1} parent=1 // pred_check
      _
    $region27: #{tpu_custom_call.1} parent=1 // pred_check_branch
      %100 = sbr.rel (0) target = $region29
    $region28: #{tpu_custom_call.1} parent=1 // pred_region
      %101 = dma.done [#allocation4], 256
    $region29: #{tpu_custom_call.1} parent=1 // pred_fallthru
      _
    %102 = vsyncpa [#allocation3], 1
    %103 = vsyncpa [#allocation6], 1
    %104 = vsyncpa [#allocation4], 1

</llo_original>
